<compile_context>
chip_gen: v7x
topology: tpu7x:2x2x1
jax: 0.10.0
libtpu: 0.0.40
codegen_flags: <defaults>
</compile_context>

<pallas_src>
import jax
import jax.numpy as jnp
from jax.experimental import pallas as pl
from jax.experimental.pallas import tpu as pltpu


def _phase_classifier_kernel(x_ref, w1_ref, b1_ref, w2_ref, b2_ref, out_ref):
    # x tile [TB, D] -> [D, TB]: one XLU transpose puts the batch on lanes for
    # both matmuls and for the (lane-dense) output store.
    x_t = x_ref[...].T.astype(jnp.bfloat16)                                # [D, TB]
    # h_t[H, TB] = W1 @ x_t   (W1 kept in PyTorch [H, D] layout, bf16, resident)
    h_t = jnp.dot(w1_ref[...], x_t, preferred_element_type=jnp.float32)   # f32 acc
    h_t = h_t + b1_ref[...]                                               # [H,TB] + [H,1]
    h_t = 1.0 / (1.0 + jnp.exp(-h_t))                                     # exact sigmoid
    # o_t[2, TB] = W2 @ h_t   (W2 in PyTorch [2, H] layout)
    o_t = jnp.dot(w2_ref[...], h_t.astype(jnp.bfloat16),
                  preferred_element_type=jnp.float32)
    out_ref[...] = (o_t + b2_ref[...]).astype(out_ref.dtype)              # [2, TB]


def phase_classifier_forward(x, w1, b1, w2, b2, *, tile_b=8192):
    """x: [B, D] f32 (or bf16 from the producer).

    Params in PyTorch layout: w1 [H, D], b1 [H], w2 [2, H], b2 [2].
    Returns [B, 2] f32.  The kernel itself produces a lane-dense [2, B] slab;
    the tiny [2, B] -> [B, 2] fix-up happens in the wrapper (≈6% of x's HBM
    traffic; consumers that can take the transposed slab should skip it).
    """
    B, D = x.shape
    H = w1.shape[0]
    out_dim = w2.shape[0]

    # Weights as bf16 MXU operands (resident in VMEM); biases as f32 column
    # vectors so they broadcast over the lane (batch) axis.
    w1 = w1.astype(jnp.bfloat16)
    w2 = w2.astype(jnp.bfloat16)
    b1c = b1.reshape(H, 1).astype(jnp.float32)
    b2c = b2.reshape(out_dim, 1).astype(jnp.float32)

    # Batch-tile selection:
    #  * small B -> one full-extent block (blocks equal to full array dims are
    #    exempt from the (8,128) rule),
    #  * otherwise a multiple of 128 (lane-dense output blocks), capped so the
    #    grid keeps >=2 steps when possible (v7x megacore) and at <=32768 rows
    #    (double-buffered x tiles stay well under the default scoped VMEM even
    #    on v5e, so no vmem_limit_bytes override is needed).
    if B <= 256:
        tb = B
    else:
        tb_cap = max(128, (min(tile_b, 32768) // 128) * 128)
        tb_half = ((pl.cdiv(B, 2) + 127) // 128) * 128
        tb = min(tb_cap, tb_half)
    grid = (pl.cdiv(B, tb),)

    cost = pl.CostEstimate(
        flops=2 * B * (D * H + H * out_dim),
        transcendentals=B * H,
        bytes_accessed=(B * D * x.dtype.itemsize          # x stream
                        + H * D * 2 + H * 4               # w1 (bf16) + b1 (f32)
                        + out_dim * H * 2 + out_dim * 4   # w2 (bf16) + b2 (f32)
                        + B * out_dim * 4),               # out (f32)
    )

    out_t = pl.pallas_call(
        _phase_classifier_kernel,
        out_shape=jax.ShapeDtypeStruct((out_dim, B), jnp.float32),
        grid=grid,
        in_specs=[
            pl.BlockSpec((tb, D), lambda i: (i, 0)),            # x: tiled over batch
            pl.BlockSpec((H, D), lambda i: (0, 0)),             # w1: resident
            pl.BlockSpec((H, 1), lambda i: (0, 0)),             # b1: resident
            pl.BlockSpec((out_dim, H), lambda i: (0, 0)),       # w2: resident
            pl.BlockSpec((out_dim, 1), lambda i: (0, 0)),       # b2: resident
        ],
        out_specs=pl.BlockSpec((out_dim, tb), lambda i: (0, i)),  # lane-dense slab
        compiler_params=pltpu.CompilerParams(
            dimension_semantics=("parallel",),   # 2 TCs on v7x; no-op on v5e/v6e
        ),
        cost_estimate=cost,
    )(x, w1, b1c, w2, b2c)

    return out_t.T


def init_params(key, input_dim, hidden_dim, out_dim=2):
    """Deterministic synthetic init mimicking nn.Linear (PyTorch [out, in] layout)."""
    k1, k2, k3, k4 = jax.random.split(key, 4)
    bound1 = 1.0 / jnp.sqrt(input_dim)
    bound2 = 1.0 / jnp.sqrt(hidden_dim)
    w1 = jax.random.uniform(k1, (hidden_dim, input_dim), jnp.float32, -bound1, bound1)
    b1 = jax.random.uniform(k2, (hidden_dim,), jnp.float32, -bound1, bound1)
    w2 = jax.random.uniform(k3, (out_dim, hidden_dim), jnp.float32, -bound2, bound2)
    b2 = jax.random.uniform(k4, (out_dim,), jnp.float32, -bound2, bound2)
    return w1, b1, w2, b2


def _reference(x, w1, b1, w2, b2):
    # Plain-JAX f32 reference — same math as the PyTorch module.
    return jax.nn.sigmoid(x @ w1.T + b1) @ w2.T + b2


if __name__ == "__main__":
    input_dim, hidden_dim = 32, 32
    key = jax.random.PRNGKey(0)
    kx, kp, kx2 = jax.random.split(key, 3)
    w1, b1, w2, b2 = init_params(kp, input_dim, hidden_dim)

    # 1) Small batch: single full-extent block.
    x = jax.random.normal(kx, (8, input_dim), jnp.float32)
    out = phase_classifier_forward(x, w1, b1, w2, b2)
    jax.block_until_ready(out)
    ref = _reference(x, w1, b1, w2, b2)
    assert out.shape == (8, 2)
    # bf16 matmul operands (f32 accum) -> tolerance a bit looser than pure f32.
    assert jnp.allclose(out, ref, atol=2e-2, rtol=2e-2), float(jnp.abs(out - ref).max())

    # 2) Gridded path with a partial edge block (272 = 2*128 + 16), small tile.
    x2 = jax.random.normal(kx2, (272, input_dim), jnp.float32)
    out2 = phase_classifier_forward(x2, w1, b1, w2, b2, tile_b=128)
    jax.block_until_ready(out2)
    ref2 = _reference(x2, w1, b1, w2, b2)
    assert out2.shape == (272, 2)
    assert jnp.allclose(out2, ref2, atol=2e-2, rtol=2e-2), float(jnp.abs(out2 - ref2).max())

    # 3) Default tile selection: >=2 grid steps, partial last block, no padding.
    out3 = phase_classifier_forward(x2, w1, b1, w2, b2)
    jax.block_until_ready(out3)
    assert out3.shape == (272, 2)
    assert jnp.allclose(out3, ref2, atol=2e-2, rtol=2e-2), float(jnp.abs(out3 - ref2).max())

    print("KERNEL_OK")
</pallas_src>

<mosaic_0001>
module attributes {stable_mosaic.version = 11 : i64} {
  func.func @_phase_classifier_kernel(%arg0: i32, %arg1: memref<8x32xf32, #tpu.memory_space<vmem>>, %arg2: memref<32x32xbf16, #tpu.memory_space<vmem>>, %arg3: memref<32x1xf32, #tpu.memory_space<vmem>>, %arg4: memref<2x32xbf16, #tpu.memory_space<vmem>>, %arg5: memref<2x1xf32, #tpu.memory_space<vmem>>, %arg6: memref<2x8xf32, #tpu.memory_space<vmem>>) attributes {dimension_semantics = [#tpu.dimension_semantics<parallel>], iteration_bounds = array<i64: 1>, scalar_prefetch = 0 : i64, scratch_operands = 0 : i64, tpu.core_type = #tpu.core_type<tc>, window_params = [{transform_indices = @transform_0, window_bounds = array<i64: 8, 32>}, {pipeline_mode = #tpu.pipeline_mode<synchronous>, transform_indices = @transform_1, window_bounds = array<i64: 32, 32>}, {pipeline_mode = #tpu.pipeline_mode<synchronous>, transform_indices = @transform_2, window_bounds = array<i64: 32, 1>}, {pipeline_mode = #tpu.pipeline_mode<synchronous>, transform_indices = @transform_3, window_bounds = array<i64: 2, 32>}, {pipeline_mode = #tpu.pipeline_mode<synchronous>, transform_indices = @transform_4, window_bounds = array<i64: 2, 1>}, {transform_indices = @transform_5, window_bounds = array<i64: 2, 8>}]} {
    %c0 = arith.constant 0 : index
    %c0_0 = arith.constant 0 : index
    %0 = vector.load %arg1[%c0, %c0_0] : memref<8x32xf32, #tpu.memory_space<vmem>>, vector<8x32xf32>
    %1 = tpu.transpose %0, [1, 0] : vector<8x32xf32> -> vector<32x8xf32>
    %2 = arith.truncf %1 : vector<32x8xf32> to vector<32x8xbf16>
    %c0_1 = arith.constant 0 : index
    %c0_2 = arith.constant 0 : index
    %3 = vector.load %arg2[%c0_1, %c0_2] : memref<32x32xbf16, #tpu.memory_space<vmem>>, vector<32x32xbf16>
    %cst = arith.constant dense<0.000000e+00> : vector<32x8xf32>
    %4 = tpu.matmul %3, %2, %cst {dimension_numbers = #tpu.dot_dimension_numbers<[1], [0], [0], [1], [0, 0, 1, 1], [], []>} : vector<32x32xbf16>, vector<32x8xbf16>, vector<32x8xf32> -> vector<32x8xf32>
    %c0_3 = arith.constant 0 : index
    %c0_4 = arith.constant 0 : index
    %5 = vector.load %arg3[%c0_3, %c0_4] : memref<32x1xf32, #tpu.memory_space<vmem>>, vector<32x1xf32>
    %6 = vector.broadcast %5 : vector<32x1xf32> to vector<32x8xf32>
    %7 = arith.addf %4, %6 : vector<32x8xf32>
    %cst_5 = arith.constant 0.000000e+00 : f32
    %8 = vector.broadcast %cst_5 : f32 to vector<32x8xf32>
    %9 = arith.subf %8, %7 : vector<32x8xf32>
    %10 = math.exp %9 : vector<32x8xf32>
    %cst_6 = arith.constant 1.000000e+00 : f32
    %11 = vector.broadcast %cst_6 : f32 to vector<32x8xf32>
    %12 = arith.addf %11, %10 : vector<32x8xf32>
    %cst_7 = arith.constant 1.000000e+00 : f32
    %13 = vector.broadcast %cst_7 : f32 to vector<32x8xf32>
    %14 = arith.divf %13, %12 : vector<32x8xf32>
    %c0_8 = arith.constant 0 : index
    %c0_9 = arith.constant 0 : index
    %15 = vector.load %arg4[%c0_8, %c0_9] : memref<2x32xbf16, #tpu.memory_space<vmem>>, vector<2x32xbf16>
    %16 = arith.truncf %14 : vector<32x8xf32> to vector<32x8xbf16>
    %cst_10 = arith.constant dense<0.000000e+00> : vector<2x8xf32>
    %17 = tpu.matmul %15, %16, %cst_10 {dimension_numbers = #tpu.dot_dimension_numbers<[1], [0], [0], [1], [0, 0, 1, 1], [], []>} : vector<2x32xbf16>, vector<32x8xbf16>, vector<2x8xf32> -> vector<2x8xf32>
    %c0_11 = arith.constant 0 : index
    %c0_12 = arith.constant 0 : index
    %18 = vector.load %arg5[%c0_11, %c0_12] : memref<2x1xf32, #tpu.memory_space<vmem>>, vector<2x1xf32>
    %19 = vector.broadcast %18 : vector<2x1xf32> to vector<2x8xf32>
    %20 = arith.addf %17, %19 : vector<2x8xf32>
    %c0_13 = arith.constant 0 : index
    %c0_14 = arith.constant 0 : index
    %21 = vector.load %arg6[%c0_13, %c0_14] : memref<2x8xf32, #tpu.memory_space<vmem>>, vector<2x8xf32>
    tpu.vector_store %arg6[%c0_13, %c0_14], %20 {strides = array<i32>} : memref<2x8xf32, #tpu.memory_space<vmem>>, vector<2x8xf32>,
    return
  }
  func.func @transform_0(%arg0: i32) -> (i32, i32) {
    %c0_i32 = arith.constant 0 : i32
    %c0_i32_0 = arith.constant 0 : i32
    return %arg0, %c0_i32 : i32, i32
  }
  func.func @transform_1(%arg0: i32) -> (i32, i32) {
    %c0_i32 = arith.constant 0 : i32
    %c0_i32_0 = arith.constant 0 : i32
    %c0_i32_1 = arith.constant 0 : i32
    return %c0_i32, %c0_i32_0 : i32, i32
  }
  func.func @transform_2(%arg0: i32) -> (i32, i32) {
    %c0_i32 = arith.constant 0 : i32
    %c0_i32_0 = arith.constant 0 : i32
    %c0_i32_1 = arith.constant 0 : i32
    return %c0_i32, %c0_i32_0 : i32, i32
  }
  func.func @transform_3(%arg0: i32) -> (i32, i32) {
    %c0_i32 = arith.constant 0 : i32
    %c0_i32_0 = arith.constant 0 : i32
    %c0_i32_1 = arith.constant 0 : i32
    return %c0_i32, %c0_i32_0 : i32, i32
  }
  func.func @transform_4(%arg0: i32) -> (i32, i32) {
    %c0_i32 = arith.constant 0 : i32
    %c0_i32_0 = arith.constant 0 : i32
    %c0_i32_1 = arith.constant 0 : i32
    return %c0_i32, %c0_i32_0 : i32, i32
  }
  func.func @transform_5(%arg0: i32) -> (i32, i32) {
    %c0_i32 = arith.constant 0 : i32
    %c0_i32_0 = arith.constant 0 : i32
    return %c0_i32, %arg0 : i32, i32
  }
}

</mosaic_0001>

<llo_original>
// kernel: tpu_custom_call.1
$region0: #{tpu_custom_call.1}
  #allocation0 [shape = 'u32[]', space=smem, size = 0x4, offset = 0x4, fixed_abs, tag = 'smem constant byte address 0x4 - core index']
  #allocation1 [shape = 'u32[144,128]{1,0:T(1,128)}', space=vmem, size = 0x12000, scoped, tag = 'internal scratch']
  %s0 = inlined_call_operand.vmem [shape: f32[8,32], index: 0, kind: input, shape index: {}]
  %s1 = inlined_call_operand.vmem [shape: bf16[32,32], index: 1, kind: input, shape index: {}]
  %s2 = inlined_call_operand.vmem [shape: f32[32,1], index: 2, kind: input, shape index: {}]
  %s3 = inlined_call_operand.vmem [shape: bf16[2,32], index: 3, kind: input, shape index: {}]
  %s4 = inlined_call_operand.vmem [shape: f32[2,1], index: 4, kind: input, shape index: {}]
  %s5 = inlined_call_operand.hbm [shape: f32[2,8], index: 5, kind: output, shape index: {}]
  %s6 = sld [smem:[#allocation0]]
  $region30: #{tpu_custom_call.1} parent=0
    _
  %s8 = ssub.s32 1, %s6
  %s9 = scalar_select 0, %s8, %s6
  $region1: #{tpu_custom_call.1} parent=0
    #allocation2 [shape = 'u8[1024]{0}', space=vmem, size = 0x400, scoped, tag = 'output window, operand 0, single buffered']
    #allocation3 [shape = 's32[1]{0}', space=sflag, size = 0x4, scoped, tag = 'scoped memory for tpu_custom_call.1']
    %10 = vsyncpa [#allocation3], 0
    // Predicated region
    $region2: #{tpu_custom_call.1} parent=1 // pred_check
      _
    $region3: #{tpu_custom_call.1} parent=1 // pred_check_branch
      %12 = sbr.rel (0) target = $region5
    $region4: #{tpu_custom_call.1} parent=1 // pred_region
      _
    $region5: #{tpu_custom_call.1} parent=1 // pred_fallthru
      _
    // Predicated region
    $region6: #{tpu_custom_call.1} parent=1 // pred_check
      _
    $region7: #{tpu_custom_call.1} parent=1 // pred_check_branch
      %14 = sbr.rel (0) target = $region9
    $region8: #{tpu_custom_call.1} parent=1 // pred_region
      _
    $region9: #{tpu_custom_call.1} parent=1 // pred_fallthru
      _
    // Predicated region
    $region10: #{tpu_custom_call.1} parent=1 // pred_check
      _
    $region11: #{tpu_custom_call.1} parent=1 // pred_check_branch
      %16 = sbr.rel (0) target = $region13
    $region12: #{tpu_custom_call.1} parent=1 // pred_region
      _
    $region13: #{tpu_custom_call.1} parent=1 // pred_fallthru
      _
    // Predicated region
    $region14: #{tpu_custom_call.1} parent=1 // pred_check
      _
    $region15: #{tpu_custom_call.1} parent=1 // pred_check_branch
      %18 = sbr.rel (0) target = $region17
    $region16: #{tpu_custom_call.1} parent=1 // pred_region
      _
    $region17: #{tpu_custom_call.1} parent=1 // pred_fallthru
      _
    // Predicated region
    $region18: #{tpu_custom_call.1} parent=1 // pred_check
      _
    $region19: #{tpu_custom_call.1} parent=1 // pred_check_branch
      %20 = sbr.rel (0) target = $region21
    $region20: #{tpu_custom_call.1} parent=1 // pred_region
      _
    $region21: #{tpu_custom_call.1} parent=1 // pred_fallthru
      _
    %v22 = vld [vmem:[%s0] sm:$0xff]
    %23 = vxpose.xlu0.b32.start [1/16] %v22, 128
    %24 = vxpose.xlu0.b32.cont [2/16] 0.0, 128
    %25 = vxpose.xlu0.b32.cont [3/16] 0.0, 128
    %26 = vxpose.xlu0.b32.cont [4/16] 0.0, 128
    %27 = vxpose.xlu0.b32.cont [5/16] 0.0, 128
    %28 = vxpose.xlu0.b32.cont [6/16] 0.0, 128
    %29 = vxpose.xlu0.b32.cont [7/16] 0.0, 128
    %30 = vxpose.xlu0.b32.cont [8/16] 0.0, 128
    %31 = vxpose.xlu0.b32.cont [9/16] 0.0, 128
    %32 = vxpose.xlu0.b32.cont [10/16] 0.0, 128
    %33 = vxpose.xlu0.b32.cont [11/16] 0.0, 128
    %34 = vxpose.xlu0.b32.cont [12/16] 0.0, 128
    %35 = vxpose.xlu0.b32.cont [13/16] 0.0, 128
    %36 = vxpose.xlu0.b32.cont [14/16] 0.0, 128
    %37 = vxpose.xlu0.b32.cont [15/16] 0.0, 128
    %38 = vxpose.xlu0.b32.end [16/16] 0.0, 128
    %v39 = vpop.trf.xlu0
    %v40 = vpop.trf.xlu0
    %v41 = vpop.trf.xlu0
    %v42 = vpop.trf.xlu0
    %v43 = vpop.trf.xlu0
    %v44 = vpop.trf.xlu0
    %v45 = vpop.trf.xlu0
    %v46 = vpop.trf.xlu0
    %v47 = vpop.trf.xlu0
    %v48 = vpop.trf.xlu0
    %v49 = vpop.trf.xlu0
    %v50 = vpop.trf.xlu0
    %v51 = vpop.trf.xlu0
    %v52 = vpop.trf.xlu0
    %v53 = vpop.trf.xlu0
    %v54 = vpop.trf.xlu0
    %v55 = vpack.c.bf16 %v40, %v39
    %v56 = vpack.c.bf16 %v42, %v41
    %v57 = vld [vmem:[%s1] sm:$0xf]
    %v58 = vld [vmem:[%s1 + $0x4] sm:$0xf]
    %v59 = vld [vmem:[%s1 + $0x8] sm:$0xf]
    %v60 = vld [vmem:[%s1 + $0xc] sm:$0xf]
    %v61 = vld [vmem:[%s2] sm:$0xff]
    %v62 = vld [vmem:[%s2 + $0x8] sm:$0xff]
    %v63 = vld [vmem:[%s2 + $0x10] sm:$0xff]
    %v64 = vld [vmem:[%s2 + $0x18] sm:$0xff]
    %66 = vset.pattern.permute.xlu0 0
    %67 = vperm.xlu0 %66, %v61
    %v68 = vpop.permute.xlu0 %67
    %71 = vset.pattern.permute.xlu0 0
    %72 = vperm.xlu0 %71, %v62
    %v73 = vpop.permute.xlu0 %72
    %76 = vset.pattern.permute.xlu0 0
    %77 = vperm.xlu0 %76, %v63
    %v78 = vpop.permute.xlu0 %77
    %81 = vset.pattern.permute.xlu0 0
    %82 = vperm.xlu0 %81, %v64
    %v83 = vpop.permute.xlu0 %82
    %v89 = vunpack.c.l.b16 %v57
    %v90 = vunpack.c.l.b16 %v58
    %v91 = vunpack.c.l.b16 %v59
    %v92 = vunpack.c.l.b16 %v60
    %v93 = vpack.c.b16 %v90, %v89
    %v94 = vpack.c.b16 %v92, %v91
    %vm95 = vcmask 261120
    %v97 = vsel %vm95, %v93, 0
    %v100 = vsel %vm95, %v94, 0
    %102 = vmatprep.subr.bf16.mxu0 0
    %103 = vmatpush1.bf16.msra.mxu0 %v55
    %104 = vmatprep.subr.bf16.mxu0 0
    %105 = vmatpush1.bf16.msra.mxu0 %v56
    %106 = vmatprep.subr.bf16.mxu0 0
    %107 = vmatpush1.bf16.msra.mxu0 0
    %108 = vmatprep.subr.bf16.mxu0 0
    %109 = vmatpush1.bf16.msra.mxu0 0
    %110 = vmatprep.subr.bf16.mxu0 0
    %111 = vmatpush1.bf16.msra.mxu0 0
    %112 = vmatprep.subr.bf16.mxu0 0
    %113 = vmatpush1.bf16.msra.mxu0 0
    %114 = vmatprep.subr.bf16.mxu0 0
    %115 = vmatpush1.bf16.msra.mxu0 0
    %116 = vmatprep.subr.bf16.mxu0 0
    %117 = vmatpush1.bf16.msra.mxu0 0
    %118 = vmatprep.subr.bf16.mxu0 0
    %119 = vmatpush1.bf16.msra.mxu0 0
    %120 = vmatprep.subr.bf16.mxu0 0
    %121 = vmatpush1.bf16.msra.mxu0 0
    %122 = vmatprep.subr.bf16.mxu0 0
    %123 = vmatpush1.bf16.msra.mxu0 0
    %124 = vmatprep.subr.bf16.mxu0 0
    %125 = vmatpush1.bf16.msra.mxu0 0
    %126 = vmatprep.subr.bf16.mxu0 0
    %127 = vmatpush1.bf16.msra.mxu0 0
    %128 = vmatprep.subr.bf16.mxu0 0
    %129 = vmatpush1.bf16.msra.mxu0 0
    %130 = vmatprep.subr.bf16.mxu0 0
    %131 = vmatpush1.bf16.msra.mxu0 0
    %132 = vmatprep.subr.bf16.mxu0 0
    %133 = vmatpush1.bf16.msra.mxu0 0
    %134 = vmatprep.mubr.bf16.mxu0 0
    %135 = vmatmul.mubr.bf16.gmra.mrb[0].mxu0 %v97
    %v136 = vpop.f32.mrb[0].mxu0
    %v137 = vadd.f32 %v68, %v136
    %v138 = vpop.f32.mrb[0].mxu0
    %v139 = vpop.f32.mrb[0].mxu0
    %v140 = vadd.f32 %v73, %v139
    %v141 = vpop.f32.mrb[0].mxu0
    %142 = vmatprep.mubr.bf16.mxu0 0
    %143 = vmatmul.mubr.bf16.gmra.mrb[0].mxu0 %v100
    %v144 = vpop.f32.mrb[0].mxu0
    %v145 = vadd.f32 %v78, %v144
    %v146 = vpop.f32.mrb[0].mxu0
    %v147 = vpop.f32.mrb[0].mxu0
    %v148 = vadd.f32 %v83, %v147
    %v149 = vpop.f32.mrb[0].mxu0
    %150 = vdwg.mxu0
    %v151 = vsub.f32 0.0, %v137
    %v152 = vsub.f32 0.0, %v140
    %v153 = vsub.f32 0.0, %v145
    %v154 = vsub.f32 0.0, %v148
    %v155 = vmul.f32 %v151, 1.442695
    %v156 = vpow.pop %v155
    %v157 = vmul.f32 %v152, 1.442695
    %v158 = vpow.pop %v157
    %v159 = vmul.f32 %v153, 1.442695
    %v160 = vpow.pop %v159
    %v161 = vmul.f32 %v154, 1.442695
    %v162 = vpow.pop %v161
    %v163 = vadd.f32 %v156, 1.0
    %v164 = vadd.f32 %v158, 1.0
    %v165 = vadd.f32 %v160, 1.0
    %v166 = vadd.f32 %v162, 1.0
    %v167 = vrcp.pop %v163
    %v168 = vmul.f32 1.0, %v167
    %v169 = vrcp.pop %v164
    %v170 = vmul.f32 1.0, %v169
    %v171 = vrcp.pop %v165
    %v172 = vmul.f32 1.0, %v171
    %v173 = vrcp.pop %v166
    %v174 = vmul.f32 1.0, %v173
    %v175 = vld [vmem:[%s3] sm:$0x1]
    %v176 = vpack.c.bf16 %v170, %v168
    %v177 = vpack.c.bf16 %v174, %v172
    %v178 = vld [vmem:[%s4] sm:$0x3]
    %180 = vset.pattern.permute.xlu0 0
    %181 = vperm.xlu0 %180, %v178
    %v182 = vpop.permute.xlu0 %181
    %v185 = vsel %vm95, %v175, 0
    %187 = vmatprep.subr.bf16.mxu0 0
    %188 = vmatpush1.bf16.msra.mxu0 %v176
    %189 = vmatprep.subr.bf16.mxu0 0
    %190 = vmatpush1.bf16.msra.mxu0 %v177
    %191 = vmatprep.subr.bf16.mxu0 0
    %192 = vmatpush1.bf16.msra.mxu0 0
    %193 = vmatprep.subr.bf16.mxu0 0
    %194 = vmatpush1.bf16.msra.mxu0 0
    %195 = vmatprep.subr.bf16.mxu0 0
    %196 = vmatpush1.bf16.msra.mxu0 0
    %197 = vmatprep.subr.bf16.mxu0 0
    %198 = vmatpush1.bf16.msra.mxu0 0
    %199 = vmatprep.subr.bf16.mxu0 0
    %200 = vmatpush1.bf16.msra.mxu0 0
    %201 = vmatprep.subr.bf16.mxu0 0
    %202 = vmatpush1.bf16.msra.mxu0 0
    %203 = vmatprep.subr.bf16.mxu0 0
    %204 = vmatpush1.bf16.msra.mxu0 0
    %205 = vmatprep.subr.bf16.mxu0 0
    %206 = vmatpush1.bf16.msra.mxu0 0
    %207 = vmatprep.subr.bf16.mxu0 0
    %208 = vmatpush1.bf16.msra.mxu0 0
    %209 = vmatprep.subr.bf16.mxu0 0
    %210 = vmatpush1.bf16.msra.mxu0 0
    %211 = vmatprep.subr.bf16.mxu0 0
    %212 = vmatpush1.bf16.msra.mxu0 0
    %213 = vmatprep.subr.bf16.mxu0 0
    %214 = vmatpush1.bf16.msra.mxu0 0
    %215 = vmatprep.subr.bf16.mxu0 0
    %216 = vmatpush1.bf16.msra.mxu0 0
    %217 = vmatprep.subr.bf16.mxu0 0
    %218 = vmatpush1.bf16.msra.mxu0 0
    %219 = vmatprep.mubr.bf16.mxu0 0
    %220 = vmatmul.mubr.bf16.gmra.mrb[0].mxu0 %v185
    %v221 = vpop.f32.mrb[0].mxu0
    %v222 = vadd.f32 %v182, %v221
    %v223 = vpop.f32.mrb[0].mxu0
    %v224 = vpop.f32.mrb[0].mxu0
    %v225 = vpop.f32.mrb[0].mxu0
    %226 = vdwg.mxu0
    %vm227 = vcmask 58368
    %228 = vst.msk [vmem:[#allocation2] sm:$0x3] %vm227, %v222
    // Predicated region
    $region22: #{tpu_custom_call.1} parent=1 // pred_check
      _
    $region23: #{tpu_custom_call.1} parent=1 // pred_check_branch
      %230 = sbr.rel (0) target = $region25
    $region24: #{tpu_custom_call.1} parent=1 // pred_region
      %s232 = ssub.s32 32, 32
      %233 = vsyncadd [#allocation3], %s232
      %s235 = sshll.u32 [#allocation2], 4
      %s236 = int_to_ptr.vmem [resolvable:$true] %s235
      %238 = dma.vmem_to_hbm [thread:$0]  %s236, 32, %s5, [#allocation3]
    $region25: #{tpu_custom_call.1} parent=1 // pred_fallthru
      _
    // Predicated region
    $region26: #{tpu_custom_call.1} parent=1 // pred_check
      _
    $region27: #{tpu_custom_call.1} parent=1 // pred_check_branch
      %240 = sbr.rel (0) target = $region29
    $region28: #{tpu_custom_call.1} parent=1 // pred_region
      %241 = dma.done [#allocation3], 32
    $region29: #{tpu_custom_call.1} parent=1 // pred_fallthru
      _
    %242 = vsyncpa [#allocation3], 1

</llo_original>
